<compile_context>
chip_gen: v7x
topology: tpu7x:2x2x1
jax: 0.10.0
libtpu: 0.0.40
codegen_flags: <defaults>
</compile_context>

<pallas_src>
import jax
import jax.numpy as jnp
from jax import lax
from jax.experimental import pallas as pl
from jax.experimental.pallas import tpu as pltpu

C_PAD = 128  # lane-dense padded channel count


# ----------------------------- VMEM budgeting -------------------------------

def _vmem_cap_bytes():
    """Cap below physical VMEM: v7x 64MiB -> ~52MiB, v5e/v6e 128MiB -> ~104MiB."""
    try:
        info = pltpu.get_tpu_info()
        phys = getattr(info, "vmem_capacity_bytes", None)
        if phys:
            return int(phys * 0.82)
    except Exception:
        pass
    return 48 * 2**20  # conservative fallback (fits every generation)


def _vmem_limit_bytes(estimate_bytes):
    return int(min(_vmem_cap_bytes(), max(8 * 2**20, int(1.25 * estimate_bytes))))


# ----------------------------- stage 1: embedding ---------------------------

def _embed_kernel(x_ref, w_ref, b_ref, o_ref):
    # f32 row tile -> bf16 cast in VMEM (VPU) -> MXU matmul with f32 acc.
    x_bf = x_ref[...].astype(jnp.bfloat16)
    o_ref[...] = (jnp.dot(x_bf, w_ref[...], preferred_element_type=jnp.float32)
                  + b_ref[...]).astype(o_ref.dtype)


def _embed(x2, emb_w_p, emb_b_p, row_tile):
    rows, in_dim = x2.shape
    Cp = C_PAD
    est = (2 * row_tile * in_dim * 4 + 2 * row_tile * Cp * 2
           + in_dim * Cp * 2 + Cp * 4)
    cost = pl.CostEstimate(
        flops=2 * rows * in_dim * Cp, transcendentals=0,
        bytes_accessed=rows * in_dim * 4 + in_dim * Cp * 2 + rows * Cp * 2)
    return pl.pallas_call(
        _embed_kernel,
        out_shape=jax.ShapeDtypeStruct((rows, Cp), jnp.bfloat16),
        grid=(pl.cdiv(rows, row_tile),),
        in_specs=[
            pl.BlockSpec((row_tile, in_dim), lambda i: (i, 0)),
            pl.BlockSpec((in_dim, Cp), lambda i: (0, 0)),
            pl.BlockSpec((1, Cp), lambda i: (0, 0)),
        ],
        out_specs=pl.BlockSpec((row_tile, Cp), lambda i: (i, 0)),
        compiler_params=pltpu.CompilerParams(
            dimension_semantics=("parallel",),
            vmem_limit_bytes=_vmem_limit_bytes(est)),
        cost_estimate=cost,
    )(x2, emb_w_p, emb_b_p)


# ------------------ stage 2: conv -> relu (+stats), then BN ------------------

def _make_conv_stats_kernel(tile_B, L, k):
    """Pass 1: Conv1d (all taps in one fat matmul) + bias + ReLU + partial stats."""
    Cp = C_PAD
    left = k // 2            # ZeroPad2d left pad
    R = tile_B * L

    def kernel(act_ref, w_ref, b_ref, y_ref, stats_ref):
        @pl.when(pl.program_id(0) == 0)
        def _():
            stats_ref[...] = jnp.zeros_like(stats_ref)

        v_bf = act_ref[...]                                       # (R, Cp) bf16
        # One MXU matmul for all k taps at once.
        m = jnp.dot(v_bf, w_ref[...],
                    preferred_element_type=jnp.float32)           # (R, k*Cp)

        # Hoisted per-row position index l (within its batch element).
        l2 = lax.broadcasted_iota(jnp.int32, (L, Cp), 0)
        l_idx = l2 if tile_B == 1 else jnp.concatenate([l2] * tile_B, axis=0)

        acc = None
        for t in range(k):
            s = t - left                         # out[l] += m_t[l + s], 0 outside
            mt = m[:, t * Cp:(t + 1) * Cp]       # lane-aligned static slice
            if s != 0:
                # Sublane roll (XLU slot) on the flat (R, Cp) view; rows that
                # would wrap past [0, L) or leak across batch elements are
                # masked to zero with one cheap VPU select.
                mt = pltpu.roll(mt, shift=(-s) % R, axis=0)
                mt = jnp.where((l_idx + s >= 0) & (l_idx + s < L), mt, 0.0)
            acc = mt if acc is None else acc + mt

        acc = jnp.maximum(acc + b_ref[...], 0.0)                  # bias + ReLU
        y_ref[...] = acc
        stats_ref[...] += jnp.concatenate(
            [jnp.sum(acc, axis=0, keepdims=True),
             jnp.sum(acc * acc, axis=0, keepdims=True)], axis=0)

    return kernel


def _make_bn_kernel(n_rows, eps):
    """Pass 2: BatchNorm1d (training mode) normalize with the global stats."""
    inv_n = 1.0 / n_rows

    def kernel(y_ref, stats_ref, g_ref, be_ref, o_ref):
        st = stats_ref[...]
        mean = st[0:1, :] * inv_n
        var = jnp.maximum(st[1:2, :] * inv_n - mean * mean, 0.0)
        o_ref[...] = (g_ref[...] * (y_ref[...] - mean) * lax.rsqrt(var + eps)
                      + be_ref[...]).astype(o_ref.dtype)

    return kernel


def _conv_bn_layer(act, B, L, k, wcat, bias, gamma, beta, eps, tile_B, out_dtype):
    Cp = C_PAD
    rows = B * L
    tile_rows = tile_B * L
    n_tiles = B // tile_B

    # Pass 1: conv + relu per tile, stats accumulated across the grid.
    est1 = (2 * tile_rows * Cp * 2 + 2 * tile_rows * Cp * 4
            + Cp * k * Cp * 2 + 3 * Cp * 4
            + 2 * tile_rows * k * Cp * 4 + 2 * tile_rows * Cp * 4)
    y, stats = pl.pallas_call(
        _make_conv_stats_kernel(tile_B, L, k),
        out_shape=(jax.ShapeDtypeStruct((rows, Cp), jnp.float32),
                   jax.ShapeDtypeStruct((2, Cp), jnp.float32)),
        grid=(n_tiles,),
        in_specs=[
            pl.BlockSpec((tile_rows, Cp), lambda i: (i, 0)),
            pl.BlockSpec((Cp, k * Cp), lambda i: (0, 0)),   # weights stay resident
            pl.BlockSpec((1, Cp), lambda i: (0, 0)),
        ],
        out_specs=(pl.BlockSpec((tile_rows, Cp), lambda i: (i, 0)),
                   pl.BlockSpec((2, Cp), lambda i: (0, 0))),  # P3 accumulator
        compiler_params=pltpu.CompilerParams(
            dimension_semantics=("arbitrary",),
            vmem_limit_bytes=_vmem_limit_bytes(est1)),
    )(act, wcat, bias)

    # Pass 2: normalize per tile ("parallel" -> megacore on v7x).
    est2 = 2 * tile_rows * Cp * 4 + 2 * tile_rows * Cp * 4 + 4 * Cp * 4
    out = pl.pallas_call(
        _make_bn_kernel(rows, eps),
        out_shape=jax.ShapeDtypeStruct((rows, Cp), out_dtype),
        grid=(n_tiles,),
        in_specs=[
            pl.BlockSpec((tile_rows, Cp), lambda i: (i, 0)),
            pl.BlockSpec((2, Cp), lambda i: (0, 0)),
            pl.BlockSpec((1, Cp), lambda i: (0, 0)),
            pl.BlockSpec((1, Cp), lambda i: (0, 0)),
        ],
        out_specs=pl.BlockSpec((tile_rows, Cp), lambda i: (i, 0)),
        compiler_params=pltpu.CompilerParams(
            dimension_semantics=("parallel",),
            vmem_limit_bytes=_vmem_limit_bytes(est2)),
    )(y, stats, gamma, beta)
    return out


# ------------------------------ parameter prep -------------------------------

def prepare_protein_cnn_params(params, kernel_sizes):
    """One-time weight plumbing (lane-dense padding, bf16 matmul weights).

    Hoisted out of the per-forward path so it is not re-materialized each step.
    """
    Cp = C_PAD
    emb_w, emb_b = params["emb_w"], params["emb_b"]
    E, in_dim = emb_w.shape
    assert E <= Cp
    prepared = {
        "in_dim": in_dim,
        "emb_w": (jnp.zeros((in_dim, Cp), jnp.float32)
                  .at[:, :E].set(jnp.transpose(emb_w)).astype(jnp.bfloat16)),
        "emb_b": jnp.zeros((1, Cp), jnp.float32).at[:, :E].set(emb_b),
        "layers": [],
        "out_channels": params["layers"][-1][0].shape[0],
    }
    for (w, b, g, be), k in zip(params["layers"], kernel_sizes):
        c_out, c_in, _ = w.shape
        assert c_out <= Cp and c_in <= Cp
        taps = [jnp.zeros((Cp, Cp), jnp.float32).at[:c_in, :c_out].set(w[:, :, t].T)
                for t in range(k)]
        prepared["layers"].append(dict(
            k=k,
            wcat=jnp.concatenate(taps, axis=1).astype(jnp.bfloat16),   # (Cp, k*Cp)
            bias=jnp.zeros((1, Cp), jnp.float32).at[:, :c_out].set(b),
            gamma=jnp.zeros((1, Cp), jnp.float32).at[:, :c_out].set(g),
            beta=jnp.zeros((1, Cp), jnp.float32).at[:, :c_out].set(be),
        ))
    return prepared


# --------------------------------- wrapper ----------------------------------

def _pick_conv_tile_b(B, L, max_tile_rows):
    cap = max(1, max_tile_rows // max(L, 1))
    for tb in range(min(B, cap), 0, -1):
        if B % tb == 0 and (tb * L) % 8 == 0:
            return tb
    # TODO(synk): when no aligned batch divisor exists, fall back to a single
    # fully-resident tile; very large unaligned inputs would need masked stats.
    return B


def protein_cnn_forward(x, prepared, eps=1e-5, row_tile=None,
                        conv_max_tile_rows=2048):
    """x: (B, L, 1024) float32 -> (B, L, num_filters[-1]) float32."""
    B, L, in_dim = x.shape
    assert in_dim == prepared["in_dim"]
    rows = B * L

    # ---- stage 1: tiled, pipelined, megacore-parallel embedding matmul ----
    if row_tile is None:
        # 2048 works on all generations (~22 MiB VMEM incl. double buffering);
        # raise to 4096 on v7x for better per-step amortization at 3.2 TB/s.
        row_tile = min(2048, max(8, -(-rows // 8) * 8))
    x2 = x.reshape(rows, in_dim)          # contiguous reshape (no HBM copy)
    act = _embed(x2, prepared["emb_w"], prepared["emb_b"], row_tile)

    # ---- stage 2: batch-tiled conv -> relu -> two-pass batchnorm per layer ----
    tile_B = _pick_conv_tile_b(B, L, conv_max_tile_rows)
    n_layers = len(prepared["layers"])
    for i, layer in enumerate(prepared["layers"]):
        out_dtype = jnp.float32 if i == n_layers - 1 else jnp.bfloat16
        act = _conv_bn_layer(act, B, L, layer["k"], layer["wcat"], layer["bias"],
                             layer["gamma"], layer["beta"], eps, tile_B, out_dtype)

    c_out = prepared["out_channels"]
    return act[:, :c_out].reshape(B, L, c_out)


# ------------------------------- references ---------------------------------

def protein_cnn_reference_f32(x, params, kernel_sizes, eps=1e-5):
    """Pure-f32 mirror of the PyTorch forward (NCL conv)."""
    emb_w, emb_b = params["emb_w"], params["emb_b"]
    v = x @ emb_w.T + emb_b
    for (w, b, g, be), k in zip(params["layers"], kernel_sizes):
        u = jnp.transpose(v, (0, 2, 1))
        left, right = k // 2, k // 2 - 1 + k % 2
        up = jnp.pad(u, ((0, 0), (0, 0), (left, right)))
        out = lax.conv_general_dilated(
            up, w, window_strides=(1,), padding="VALID",
            dimension_numbers=("NCH", "OIH", "NCH"))
        out = out + b[None, :, None]
        out = jnp.maximum(out, 0.0)
        mean = jnp.mean(out, axis=(0, 2), keepdims=True)
        var = jnp.mean(jnp.square(out - mean), axis=(0, 2), keepdims=True)
        out = (g[None, :, None] * (out - mean) / jnp.sqrt(var + eps)
               + be[None, :, None])
        v = jnp.transpose(out, (0, 2, 1))
    return v


def protein_cnn_reference_matched(x, params, kernel_sizes, eps=1e-5):
    """Precision-matched reference: same bf16 cast points as the kernel, f32 acc."""
    emb_w, emb_b = params["emb_w"], params["emb_b"]
    B, L, _ = x.shape
    v = (jnp.dot(x.reshape(B * L, -1).astype(jnp.bfloat16),
                 emb_w.T.astype(jnp.bfloat16),
                 preferred_element_type=jnp.float32) + emb_b)
    v = v.astype(jnp.bfloat16).astype(jnp.float32).reshape(B, L, -1)
    for (w, b, g, be), k in zip(params["layers"], kernel_sizes):
        left = k // 2
        vb = v.astype(jnp.bfloat16)
        vp = jnp.pad(vb, ((0, 0), (left, k - 1 - left), (0, 0)))
        acc = jnp.zeros((B, L, w.shape[0]), jnp.float32)
        for t in range(k):
            wt = w[:, :, t].T.astype(jnp.bfloat16)
            acc = acc + jnp.dot(vp[:, t:t + L, :], wt,
                                preferred_element_type=jnp.float32)
        acc = jnp.maximum(acc + b, 0.0)
        mean = jnp.mean(acc, axis=(0, 1), keepdims=True)
        var = jnp.mean(jnp.square(acc - mean), axis=(0, 1), keepdims=True)
        v = g * (acc - mean) * lax.rsqrt(var + eps) + be
    return v


if __name__ == "__main__":
    # config (__C.PROTEIN.*): modelT5=True, padding=True
    EMBEDDING_DIM = 32
    NUM_FILTERS = [32, 64]
    KERNEL_SIZE = [3, 6]
    B, L, T5_DIM = 2, 16, 1024

    key = jax.random.PRNGKey(0)
    ks = jax.random.split(key, 3 + 4 * len(NUM_FILTERS))

    params = {
        "emb_w": 0.02 * jax.random.normal(ks[0], (EMBEDDING_DIM, T5_DIM), jnp.float32),
        "emb_b": 0.02 * jax.random.normal(ks[1], (EMBEDDING_DIM,), jnp.float32),
        "layers": [],
    }
    in_ch = [EMBEDDING_DIM] + NUM_FILTERS
    for i in range(len(NUM_FILTERS)):
        kw = ks[3 + 4 * i: 3 + 4 * (i + 1)]
        w = 0.1 * jax.random.normal(kw[0], (in_ch[i + 1], in_ch[i], KERNEL_SIZE[i]),
                                    jnp.float32)
        b = 0.1 * jax.random.normal(kw[1], (in_ch[i + 1],), jnp.float32)
        g = 1.0 + 0.1 * jax.random.normal(kw[2], (in_ch[i + 1],), jnp.float32)
        be = 0.1 * jax.random.normal(kw[3], (in_ch[i + 1],), jnp.float32)
        params["layers"].append((w, b, g, be))

    x = jax.random.normal(ks[2], (B, L, T5_DIM), jnp.float32)

    # One-time weight plumbing (hoisted out of the per-step path).
    prepared = prepare_protein_cnn_params(params, KERNEL_SIZE)

    # Small tiles so the tiny demo still exercises the pipelined stage-1 grid
    # (2 row tiles) and the stage-2 cross-tile stats accumulator (2 batch tiles).
    out = protein_cnn_forward(x, prepared, row_tile=16, conv_max_tile_rows=16)
    out = jax.block_until_ready(out)
    assert out.shape == (B, L, NUM_FILTERS[-1]), out.shape

    # Tight check vs the precision-matched (bf16-cast) reference.
    ref_m = protein_cnn_reference_matched(x, params, KERNEL_SIZE)
    err_m = float(jnp.max(jnp.abs(out - ref_m)))
    assert err_m < 5e-3, f"max abs error vs matched reference {err_m}"

    # Sanity check vs the pure-f32 PyTorch mirror (bf16-level tolerance).
    ref_f = protein_cnn_reference_f32(x, params, KERNEL_SIZE)
    err_f = float(jnp.max(jnp.abs(out - ref_f)))
    assert err_f < 1e-1, f"max abs error vs f32 reference {err_f}"

    print("KERNEL_OK")
</pallas_src>

<mosaic_0001>
module attributes {stable_mosaic.version = 11 : i64} {
  func.func @_embed_kernel(%arg0: i32, %arg1: memref<16x1024xf32, #tpu.memory_space<vmem>>, %arg2: memref<1024x128xbf16, #tpu.memory_space<vmem>>, %arg3: memref<1x128xf32, #tpu.memory_space<vmem>>, %arg4: memref<16x128xbf16, #tpu.memory_space<vmem>>) attributes {dimension_semantics = [#tpu.dimension_semantics<parallel>], iteration_bounds = array<i64: 2>, scalar_prefetch = 0 : i64, scratch_operands = 0 : i64, tpu.core_type = #tpu.core_type<tc>, window_params = [{transform_indices = @transform_0, window_bounds = array<i64: 16, 1024>}, {pipeline_mode = #tpu.pipeline_mode<synchronous>, transform_indices = @transform_1, window_bounds = array<i64: 1024, 128>}, {pipeline_mode = #tpu.pipeline_mode<synchronous>, transform_indices = @transform_2, window_bounds = array<i64: 1, 128>}, {transform_indices = @transform_3, window_bounds = array<i64: 16, 128>}]} {
    %c0 = arith.constant 0 : index
    %c0_0 = arith.constant 0 : index
    %0 = vector.load %arg1[%c0, %c0_0] : memref<16x1024xf32, #tpu.memory_space<vmem>>, vector<16x1024xf32>
    %1 = arith.truncf %0 : vector<16x1024xf32> to vector<16x1024xbf16>
    %c0_1 = arith.constant 0 : index
    %c0_2 = arith.constant 0 : index
    %2 = vector.load %arg2[%c0_1, %c0_2] : memref<1024x128xbf16, #tpu.memory_space<vmem>>, vector<1024x128xbf16>
    %cst = arith.constant dense<0.000000e+00> : vector<16x128xf32>
    %3 = tpu.matmul %1, %2, %cst {dimension_numbers = #tpu.dot_dimension_numbers<[1], [0], [0], [1], [0, 0, 1, 1], [], []>} : vector<16x1024xbf16>, vector<1024x128xbf16>, vector<16x128xf32> -> vector<16x128xf32>
    %c0_3 = arith.constant 0 : index
    %c0_4 = arith.constant 0 : index
    %4 = vector.load %arg3[%c0_3, %c0_4] : memref<1x128xf32, #tpu.memory_space<vmem>>, vector<1x128xf32>
    %5 = vector.broadcast %4 : vector<1x128xf32> to vector<16x128xf32>
    %6 = arith.addf %3, %5 : vector<16x128xf32>
    %7 = arith.truncf %6 : vector<16x128xf32> to vector<16x128xbf16>
    %c0_5 = arith.constant 0 : index
    %c0_6 = arith.constant 0 : index
    %8 = vector.load %arg4[%c0_5, %c0_6] : memref<16x128xbf16, #tpu.memory_space<vmem>>, vector<16x128xbf16>
    tpu.vector_store %arg4[%c0_5, %c0_6], %7 {strides = array<i32>} : memref<16x128xbf16, #tpu.memory_space<vmem>>, vector<16x128xbf16>,
    return
  }
  func.func @transform_0(%arg0: i32) -> (i32, i32) {
    %c0_i32 = arith.constant 0 : i32
    %c0_i32_0 = arith.constant 0 : i32
    return %arg0, %c0_i32 : i32, i32
  }
  func.func @transform_1(%arg0: i32) -> (i32, i32) {
    %c0_i32 = arith.constant 0 : i32
    %c0_i32_0 = arith.constant 0 : i32
    %c0_i32_1 = arith.constant 0 : i32
    return %c0_i32, %c0_i32_0 : i32, i32
  }
  func.func @transform_2(%arg0: i32) -> (i32, i32) {
    %c0_i32 = arith.constant 0 : i32
    %c0_i32_0 = arith.constant 0 : i32
    %c0_i32_1 = arith.constant 0 : i32
    return %c0_i32, %c0_i32_0 : i32, i32
  }
  func.func @transform_3(%arg0: i32) -> (i32, i32) {
    %c0_i32 = arith.constant 0 : i32
    %c0_i32_0 = arith.constant 0 : i32
    return %arg0, %c0_i32 : i32, i32
  }
}

</mosaic_0001>

<llo_original>
// kernel: tpu_custom_call.1
$region0: #{tpu_custom_call.1}
  #allocation0 [shape = 'u32[]', space=smem, size = 0x4, offset = 0x4, fixed_abs, tag = 'smem constant byte address 0x4 - core index']
  #allocation1 [shape = 'u32[144,128]{1,0:T(1,128)}', space=vmem, size = 0x12000, scoped, tag = 'internal scratch']
  %s0 = inlined_call_operand.hbm [shape: f32[32,1024], index: 0, kind: input, shape index: {}]
  %s1 = inlined_call_operand.hbm [shape: bf16[1024,128], index: 1, kind: input, shape index: {}]
  %s2 = inlined_call_operand.vmem [shape: f32[1,128], index: 2, kind: input, shape index: {}]
  %s3 = inlined_call_operand.hbm [shape: bf16[32,128], index: 3, kind: output, shape index: {}]
  %s4 = sld [smem:[#allocation0]]
  $region53: #{tpu_custom_call.1} parent=0
    _
  %s6 = ssub.s32 1, %s4
  %s7 = scalar_select 0, %s6, %s4
  $region1: #{tpu_custom_call.1} parent=0
    #allocation2 [shape = 'u8[131072]{0}', space=vmem, size = 0x20000, scoped, tag = 'input window, operand 0']
    #allocation3 [shape = 's32[2]{0}', space=sflag, size = 0x8, scoped, tag = 'scoped memory for tpu_custom_call.1']
    #allocation4 [shape = 's32[2]{0}', space=sflag, size = 0x8, scoped, tag = 'scoped memory for tpu_custom_call.1']
    #allocation5 [shape = 'u8[262144]{0}', space=vmem, size = 0x40000, scoped, tag = 'input window, operand 1, single buffered']
    #allocation6 [shape = 's32[1]{0}', space=sflag, size = 0x4, scoped, tag = 'scoped memory for tpu_custom_call.1']
    #allocation7 [shape = 'u8[8192]{0}', space=vmem, size = 0x2000, scoped, tag = 'output window, operand 0']
    %8 = vsyncpa [#allocation3], 0
    %s9 = scalar_lea.sflag [#allocation3], 1
    %10 = vsyncpa %s9, 0
    %11 = vsyncpa [#allocation6], 0
    %12 = vsyncpa [#allocation4], 0
    %s13 = scalar_lea.sflag [#allocation4], 1
    %14 = vsyncpa %s13, 0
    loop: start=0, step=1, limit=4
    $region2: #{tpu_custom_call.1} parent=1 // loop_pre_header
      _
    $region3: #{tpu_custom_call.1} parent=1 // loop_header
      %s16 = sphi 0, %s20
      %p17 = scmp.ge.s32.totalorder %s16, 4
      %s26 = sphi 0, %s28
      %s29 = sphi 0, %s26
      %s30 = sphi 0, %s29
      %s46 = sphi 0, %s30
      %s50 = sphi 0, %s50
      %s52 = sphi 0, %s50
      %s53 = sphi 0, %s52
      %s67 = sphi 0, %s53
      %s71 = sphi 0, %s71
      %s73 = sphi 0, %s71
      %s74 = sphi 0, %s73
      %s88 = sphi 0, %s74
      %s94 = sphi 0, %s96
      %s97 = sphi 0, %s94
      %s98 = sphi 0, %s97
      %s114 = sphi 0, %s98
    $region4: #{tpu_custom_call.1} parent=1 // loop_header_branch
      %19 = sbr.rel (%p17) target = $region8
    $region5: #{tpu_custom_call.1} parent=1 // loop_body
      %s21 = ssub.s32 %s16, 1
      %s22 = ssub.s32 %s16, 2
      %s23 = sadd.s32 %s16, 1
      %s24 = ssub.s32 %s16, %s23
      %p25 = scmp.eq.s32.totalorder %s24, 0
      %s27 = sadd.s32 %s26, 1
      %s28 = scalar_select %p25, %s26, %s27
      %p31 = pneg %p25
      %p32 = scmp.eq.s32.totalorder %s16, 1
      %p33 = por %p31, %p32
      %p34 = scmp.ne.s32.totalorder %s26, %s29
      %p35 = scmp.eq.s32.totalorder %s16, 0
      %p36 = por %p34, %p35
      %p37 = scmp.ne.s32.totalorder %s26, %s29
      %p38 = scmp.eq.s32.totalorder %s21, 1
      %p39 = por %p37, %p38
      %p40 = scmp.ne.s32.totalorder %s29, %s30
      %p41 = scmp.eq.s32.totalorder %s21, 0
      %p42 = por %p40, %p41
      %p43 = scmp.ne.s32.totalorder %s29, %s30
      %p44 = scmp.eq.s32.totalorder %s22, 1
      %p45 = por %p43, %p44
      %p47 = scmp.ne.s32.totalorder %s30, %s46
      %p48 = scmp.eq.s32.totalorder %s22, 0
      %p49 = por %p47, %p48
      %s51 = sadd.s32 %s50, 1
      %p54 = scmp.eq.s32.totalorder %s16, 1
      %p55 = scmp.ne.s32.totalorder %s50, %s52
      %p56 = scmp.eq.s32.totalorder %s16, 0
      %p57 = por %p55, %p56
      %p58 = scmp.ne.s32.totalorder %s50, %s52
      %p59 = scmp.eq.s32.totalorder %s21, 1
      %p60 = por %p58, %p59
      %p61 = scmp.ne.s32.totalorder %s52, %s53
      %p62 = scmp.eq.s32.totalorder %s21, 0
      %p63 = por %p61, %p62
      %p64 = scmp.ne.s32.totalorder %s52, %s53
      %p65 = scmp.eq.s32.totalorder %s22, 1
      %p66 = por %p64, %p65
      %p68 = scmp.ne.s32.totalorder %s53, %s67
      %p69 = scmp.eq.s32.totalorder %s22, 0
      %p70 = por %p68, %p69
      %s72 = sadd.s32 %s71, 1
      %p75 = scmp.eq.s32.totalorder %s16, 1
      %p76 = scmp.ne.s32.totalorder %s71, %s73
      %p77 = scmp.eq.s32.totalorder %s16, 0
      %p78 = por %p76, %p77
      %p79 = scmp.ne.s32.totalorder %s71, %s73
      %p80 = scmp.eq.s32.totalorder %s21, 1
      %p81 = por %p79, %p80
      %p82 = scmp.ne.s32.totalorder %s73, %s74
      %p83 = scmp.eq.s32.totalorder %s21, 0
      %p84 = por %p82, %p83
      %p85 = scmp.ne.s32.totalorder %s73, %s74
      %p86 = scmp.eq.s32.totalorder %s22, 1
      %p87 = por %p85, %p86
      %p89 = scmp.ne.s32.totalorder %s74, %s88
      %p90 = scmp.eq.s32.totalorder %s22, 0
      %p91 = por %p89, %p90
      %s92 = ssub.s32 %s16, %s23
      %p93 = scmp.eq.s32.totalorder %s92, 0
      %s95 = sadd.s32 %s94, 1
      %s96 = scalar_select %p93, %s94, %s95
      %p99 = pneg %p93
      %p100 = scmp.eq.s32.totalorder %s16, 1
      %p101 = por %p99, %p100
      %p102 = scmp.ne.s32.totalorder %s94, %s97
      %p103 = scmp.eq.s32.totalorder %s16, 0
      %p104 = por %p102, %p103
      %p105 = scmp.ne.s32.totalorder %s94, %s97
      %p106 = scmp.eq.s32.totalorder %s21, 1
      %p107 = por %p105, %p106
      %p108 = scmp.ne.s32.totalorder %s97, %s98
      %p109 = scmp.eq.s32.totalorder %s21, 0
      %p110 = por %p108, %p109
      %p111 = scmp.ne.s32.totalorder %s97, %s98
      %p112 = scmp.eq.s32.totalorder %s22, 1
      %p113 = por %p111, %p112
      %p115 = scmp.ne.s32.totalorder %s98, %s114
      %p116 = scmp.eq.s32.totalorder %s22, 0
      %p117 = por %p115, %p116
      %p118 = scmp.le.s32.totalorder 1, %s16
      %p119 = scmp.lt.s32.totalorder %s16, 3
      %p120 = pnand %p118, %p119
      %p121 = pneg %p120
      // Predicated region
      $region9: #{tpu_custom_call.1} parent=5 // pred_check
        _
      $region10: #{tpu_custom_call.1} parent=5 // pred_check_branch
        %123 = sbr.rel (%p120) target = $region12
      $region11: #{tpu_custom_call.1} parent=5 // pred_region
        %s124 = ssub.s32 %s16, 1
        // Predicated region
        $region13: #{tpu_custom_call.1} parent=11 // pred_check
          %p125 = pneg %p63
        $region14: #{tpu_custom_call.1} parent=11 // pred_check_branch
          %127 = sbr.rel (%p125) target = $region16
        $region15: #{tpu_custom_call.1} parent=11 // pred_region
          %s129 = ssub.s32 8192, 8192
          %130 = vsyncadd [#allocation6], %s129
          %s131 = sshll.u32 [#allocation5], 4
          %s132 = int_to_ptr.vmem [resolvable:$true] %s131
          %137 = dma.hbm_to_vmem [thread:$0]  %s1, 8192, %s132, [#allocation6], 64, 64, 4
        $region16: #{tpu_custom_call.1} parent=11 // pred_fallthru
          _
        // Predicated region
        $region17: #{tpu_custom_call.1} parent=11 // pred_check
          %p138 = pneg %p84
        $region18: #{tpu_custom_call.1} parent=11 // pred_check_branch
          %140 = sbr.rel (%p138) target = $region20
        $region19: #{tpu_custom_call.1} parent=11 // pred_region
          _
        $region20: #{tpu_custom_call.1} parent=11 // pred_fallthru
          _
      $region12: #{tpu_custom_call.1} parent=5 // pred_fallthru
        _
      %p141 = scmp.lt.s32.totalorder %s16, 2
      // Predicated region
      $region21: #{tpu_custom_call.1} parent=5 // pred_check
        %p142 = pneg %p141
      $region22: #{tpu_custom_call.1} parent=5 // pred_check_branch
        %144 = sbr.rel (%p142) target = $region24
      $region23: #{tpu_custom_call.1} parent=5 // pred_region
        // Predicated region
        $region25: #{tpu_custom_call.1} parent=23 // pred_check
          %p145 = pneg %p36
        $region26: #{tpu_custom_call.1} parent=23 // pred_check_branch
          %147 = sbr.rel (%p145) target = $region28
        $region27: #{tpu_custom_call.1} parent=23 // pred_region
          %s148 = sand.u32 %s26, 1
          %s149 = scalar_lea.sflag [#allocation3], %s148
          %s150 = sand.u32 %s26, 1
          %s151 = smul.addr %s150, 128
          %s152 = scalar_lea.vmem [#allocation2], %s151
          %s153 = smul.u32 2, %s16
          %s155 = ssub.s32 2048, 2048
          %156 = vsyncadd %s149, %s155
          %s157 = smul.addr %s153, 8
          %s158 = smul.addr %s157, 128
          %s159 = scalar_lea.hbm %s0, %s158
          %s160 = sshll.u32 %s152, 4
          %s161 = int_to_ptr.vmem [resolvable:$true] %s160
          %166 = dma.hbm_to_vmem [thread:$0]  %s159, 2048, %s161, %s149, 1024, 1024, 64
        $region28: #{tpu_custom_call.1} parent=23 // pred_fallthru
          _
      $region24: #{tpu_custom_call.1} parent=5 // pred_fallthru
        _
      %p167 = scmp.le.s32.totalorder 1, %s16
      %p168 = scmp.lt.s32.totalorder %s16, 3
      %p169 = pnand %p167, %p168
      %p170 = pneg %p169
      // Predicated region
      $region29: #{tpu_custom_call.1} parent=5 // pred_check
        _
      $region30: #{tpu_custom_call.1} parent=5 // pred_check_branch
        %172 = sbr.rel (%p169) target = $region32
      $region31: #{tpu_custom_call.1} parent=5 // pred_region
        %s173 = ssub.s32 %s16, 1
        %s174 = sand.u32 %s29, 1
        %s175 = scalar_lea.sflag [#allocation3], %s174
        %s176 = sand.u32 %s29, 1
        %s177 = smul.addr %s176, 128
        %s178 = scalar_lea.vmem [#allocation2], %s177
        // Predicated region
        $region33: #{tpu_custom_call.1} parent=31 // pred_check
          %p179 = pneg %p42
        $region34: #{tpu_custom_call.1} parent=31 // pred_check_branch
          %181 = sbr.rel (%p179) target = $region36
        $region35: #{tpu_custom_call.1} parent=31 // pred_region
          %182 = dma.done %s175, 2048
        $region36: #{tpu_custom_call.1} parent=31 // pred_fallthru
          _
        // Predicated region
        $region37: #{tpu_custom_call.1} parent=31 // pred_check
          %p183 = pneg %p63
        $region38: #{tpu_custom_call.1} parent=31 // pred_check_branch
          %185 = sbr.rel (%p183) target = $region40
        $region39: #{tpu_custom_call.1} parent=31 // pred_region
          %186 = dma.done [#allocation6], 8192
        $region40: #{tpu_custom_call.1} parent=31 // pred_fallthru
          _
        %s187 = sand.u32 %s29, 1
        %s188 = scalar_lea.sflag [#allocation3], %s187
        %s189 = sand.u32 %s29, 1
        %s190 = smul.addr %s189, 128
        %s191 = scalar_lea.vmem [#allocation2], %s190
        %p192 = pneg %p42
        %p193 = pneg %p39
        %p194 = pneg %p63
        %p195 = pneg %p60
        %p196 = pneg %p84
        %p197 = pneg %p81
        %p198 = pneg %p110
        %p199 = pneg %p107
        %s200 = sand.u32 %s97, 1
        %s201 = scalar_lea.sflag [#allocation4], %s200
        %s202 = sand.u32 %s97, 1
        %s203 = smul.addr %s202, 8
        %s204 = scalar_lea.vmem [#allocation7], %s203
        %s205 = smul.u32 2, %s21
        %s206 = smul.u32 2, %s21
        %v208 = vld [vmem:[%s178] sm:$0xff]
        %v209 = vld [vmem:[%s178 + $0x8] sm:$0xff]
        %v210 = vld [vmem:[%s178 + $0x10] sm:$0xff]
        %v211 = vld [vmem:[%s178 + $0x18] sm:$0xff]
        %v212 = vld [vmem:[%s178 + $0x20] sm:$0xff]
        %v213 = vld [vmem:[%s178 + $0x28] sm:$0xff]
        %v214 = vld [vmem:[%s178 + $0x30] sm:$0xff]
        %v215 = vld [vmem:[%s178 + $0x38] sm:$0xff]
        %v216 = vld [vmem:[%s178 + $0x40] sm:$0xff]
        %v217 = vld [vmem:[%s178 + $0x48] sm:$0xff]
        %v218 = vld [vmem:[%s178 + $0x50] sm:$0xff]
        %v219 = vld [vmem:[%s178 + $0x58] sm:$0xff]
        %v220 = vld [vmem:[%s178 + $0x60] sm:$0xff]
        %v221 = vld [vmem:[%s178 + $0x68] sm:$0xff]
        %v222 = vld [vmem:[%s178 + $0x70] sm:$0xff]
        %v223 = vld [vmem:[%s178 + $0x78] sm:$0xff]
        %v224 = vpack.c.bf16 %v216, %v208
        %v225 = vpack.c.bf16 %v217, %v209
        %v226 = vpack.c.bf16 %v218, %v210
        %v227 = vpack.c.bf16 %v219, %v211
        %v228 = vpack.c.bf16 %v220, %v212
        %v229 = vpack.c.bf16 %v221, %v213
        %v230 = vpack.c.bf16 %v222, %v214
        %v231 = vpack.c.bf16 %v223, %v215
        %v232 = vld [vmem:[#allocation5] sm:$0xf]
        %v233 = vld [vmem:[#allocation5 + $0x4] sm:$0xf]
        %v234 = vld [vmem:[#allocation5 + $0x8] sm:$0xf]
        %v235 = vld [vmem:[#allocation5 + $0xc] sm:$0xf]
        %v236 = vld [vmem:[#allocation5 + $0x10] sm:$0xf]
        %v237 = vld [vmem:[#allocation5 + $0x14] sm:$0xf]
        %v238 = vld [vmem:[#allocation5 + $0x18] sm:$0xf]
        %v239 = vld [vmem:[#allocation5 + $0x1c] sm:$0xf]
        %v240 = vld [vmem:[#allocation5 + $0x20] sm:$0xf]
        %v241 = vld [vmem:[#allocation5 + $0x24] sm:$0xf]
        %v242 = vld [vmem:[#allocation5 + $0x28] sm:$0xf]
        %v243 = vld [vmem:[#allocation5 + $0x2c] sm:$0xf]
        %v244 = vld [vmem:[#allocation5 + $0x30] sm:$0xf]
        %v245 = vld [vmem:[#allocation5 + $0x34] sm:$0xf]
        %v246 = vld [vmem:[#allocation5 + $0x38] sm:$0xf]
        %v247 = vld [vmem:[#allocation5 + $0x3c] sm:$0xf]
        %v248 = vld [vmem:[#allocation5 + $0x40] sm:$0xf]
        %v249 = vld [vmem:[#allocation5 + $0x44] sm:$0xf]
        %v250 = vld [vmem:[#allocation5 + $0x48] sm:$0xf]
        %v251 = vld [vmem:[#allocation5 + $0x4c] sm:$0xf]
        %v252 = vld [vmem:[#allocation5 + $0x50] sm:$0xf]
        %v253 = vld [vmem:[#allocation5 + $0x54] sm:$0xf]
        %v254 = vld [vmem:[#allocation5 + $0x58] sm:$0xf]
        %v255 = vld [vmem:[#allocation5 + $0x5c] sm:$0xf]
        %v256 = vld [vmem:[#allocation5 + $0x60] sm:$0xf]
        %v257 = vld [vmem:[#allocation5 + $0x64] sm:$0xf]
        %v258 = vld [vmem:[#allocation5 + $0x68] sm:$0xf]
        %v259 = vld [vmem:[#allocation5 + $0x6c] sm:$0xf]
        %v260 = vld [vmem:[#allocation5 + $0x70] sm:$0xf]
        %v261 = vld [vmem:[#allocation5 + $0x74] sm:$0xf]
        %v262 = vld [vmem:[#allocation5 + $0x78] sm:$0xf]
        %v263 = vld [vmem:[#allocation5 + $0x7c] sm:$0xf]
        %v264 = vld [vmem:[#allocation5 + $0x80] sm:$0xf]
        %v265 = vld [vmem:[#allocation5 + $0x84] sm:$0xf]
        %v266 = vld [vmem:[#allocation5 + $0x88] sm:$0xf]
        %v267 = vld [vmem:[#allocation5 + $0x8c] sm:$0xf]
        %v268 = vld [vmem:[#allocation5 + $0x90] sm:$0xf]
        %v269 = vld [vmem:[#allocation5 + $0x94] sm:$0xf]
        %v270 = vld [vmem:[#allocation5 + $0x98] sm:$0xf]
        %v271 = vld [vmem:[#allocation5 + $0x9c] sm:$0xf]
        %v272 = vld [vmem:[#allocation5 + $0xa0] sm:$0xf]
        %v273 = vld [vmem:[#allocation5 + $0xa4] sm:$0xf]
        %v274 = vld [vmem:[#allocation5 + $0xa8] sm:$0xf]
        %v275 = vld [vmem:[#allocation5 + $0xac] sm:$0xf]
        %v276 = vld [vmem:[#allocation5 + $0xb0] sm:$0xf]
        %v277 = vld [vmem:[#allocation5 + $0xb4] sm:$0xf]
        %v278 = vld [vmem:[#allocation5 + $0xb8] sm:$0xf]
        %v279 = vld [vmem:[#allocation5 + $0xbc] sm:$0xf]
        %v280 = vld [vmem:[#allocation5 + $0xc0] sm:$0xf]
        %v281 = vld [vmem:[#allocation5 + $0xc4] sm:$0xf]
        %v282 = vld [vmem:[#allocation5 + $0xc8] sm:$0xf]
        %v283 = vld [vmem:[#allocation5 + $0xcc] sm:$0xf]
        %v284 = vld [vmem:[#allocation5 + $0xd0] sm:$0xf]
        %v285 = vld [vmem:[#allocation5 + $0xd4] sm:$0xf]
        %v286 = vld [vmem:[#allocation5 + $0xd8] sm:$0xf]
        %v287 = vld [vmem:[#allocation5 + $0xdc] sm:$0xf]
        %v288 = vld [vmem:[#allocation5 + $0xe0] sm:$0xf]
        %v289 = vld [vmem:[#allocation5 + $0xe4] sm:$0xf]
        %v290 = vld [vmem:[#allocation5 + $0xe8] sm:$0xf]
        %v291 = vld [vmem:[#allocation5 + $0xec] sm:$0xf]
        %v292 = vld [vmem:[#allocation5 + $0xf0] sm:$0xf]
        %v293 = vld [vmem:[#allocation5 + $0xf4] sm:$0xf]
        %v294 = vld [vmem:[#allocation5 + $0xf8] sm:$0xf]
        %v295 = vld [vmem:[#allocation5 + $0xfc] sm:$0xf]
        %v296 = vld [vmem:[#allocation5 + $0x100] sm:$0xf]
        %v297 = vld [vmem:[#allocation5 + $0x104] sm:$0xf]
        %v298 = vld [vmem:[#allocation5 + $0x108] sm:$0xf]
        %v299 = vld [vmem:[#allocation5 + $0x10c] sm:$0xf]
        %v300 = vld [vmem:[#allocation5 + $0x110] sm:$0xf]
        %v301 = vld [vmem:[#allocation5 + $0x114] sm:$0xf]
        %v302 = vld [vmem:[#allocation5 + $0x118] sm:$0xf]
        %v303 = vld [vmem:[#allocation5 + $0x11c] sm:$0xf]
        %v304 = vld [vmem:[#allocation5 + $0x120] sm:$0xf]
        %v305 = vld [vmem:[#allocation5 + $0x124] sm:$0xf]
        %v306 = vld [vmem:[#allocation5 + $0x128] sm:$0xf]
        %v307 = vld [vmem:[#allocation5 + $0x12c] sm:$0xf]
        %v308 = vld [vmem:[#allocation5 + $0x130] sm:$0xf]
        %v309 = vld [vmem:[#allocation5 + $0x134] sm:$0xf]
        %v310 = vld [vmem:[#allocation5 + $0x138] sm:$0xf]
        %v311 = vld [vmem:[#allocation5 + $0x13c] sm:$0xf]
        %v312 = vld [vmem:[#allocation5 + $0x140] sm:$0xf]
        %v313 = vld [vmem:[#allocation5 + $0x144] sm:$0xf]
        %v314 = vld [vmem:[#allocation5 + $0x148] sm:$0xf]
        %v315 = vld [vmem:[#allocation5 + $0x14c] sm:$0xf]
        %v316 = vld [vmem:[#allocation5 + $0x150] sm:$0xf]
        %v317 = vld [vmem:[#allocation5 + $0x154] sm:$0xf]
        %v318 = vld [vmem:[#allocation5 + $0x158] sm:$0xf]
        %v319 = vld [vmem:[#allocation5 + $0x15c] sm:$0xf]
        %v320 = vld [vmem:[#allocation5 + $0x160] sm:$0xf]
        %v321 = vld [vmem:[#allocation5 + $0x164] sm:$0xf]
        %v322 = vld [vmem:[#allocation5 + $0x168] sm:$0xf]
        %v323 = vld [vmem:[#allocation5 + $0x16c] sm:$0xf]
        %v324 = vld [vmem:[#allocation5 + $0x170] sm:$0xf]
        %v325 = vld [vmem:[#allocation5 + $0x174] sm:$0xf]
        %v326 = vld [vmem:[#allocation5 + $0x178] sm:$0xf]
        %v327 = vld [vmem:[#allocation5 + $0x17c] sm:$0xf]
        %v328 = vld [vmem:[#allocation5 + $0x180] sm:$0xf]
        %v329 = vld [vmem:[#allocation5 + $0x184] sm:$0xf]
        %v330 = vld [vmem:[#allocation5 + $0x188] sm:$0xf]
        %v331 = vld [vmem:[#allocation5 + $0x18c] sm:$0xf]
        %v332 = vld [vmem:[#allocation5 + $0x190] sm:$0xf]
        %v333 = vld [vmem:[#allocation5 + $0x194] sm:$0xf]
        %v334 = vld [vmem:[#allocation5 + $0x198] sm:$0xf]
        %v335 = vld [vmem:[#allocation5 + $0x19c] sm:$0xf]
        %v336 = vld [vmem:[#allocation5 + $0x1a0] sm:$0xf]
        %v337 = vld [vmem:[#allocation5 + $0x1a4] sm:$0xf]
        %v338 = vld [vmem:[#allocation5 + $0x1a8] sm:$0xf]
        %v339 = vld [vmem:[#allocation5 + $0x1ac] sm:$0xf]
        %v340 = vld [vmem:[#allocation5 + $0x1b0] sm:$0xf]
        %v341 = vld [vmem:[#allocation5 + $0x1b4] sm:$0xf]
        %v342 = vld [vmem:[#allocation5 + $0x1b8] sm:$0xf]
        %v343 = vld [vmem:[#allocation5 + $0x1bc] sm:$0xf]
        %v344 = vld [vmem:[#allocation5 + $0x1c0] sm:$0xf]
        %v345 = vld [vmem:[#allocation5 + $0x1c4] sm:$0xf]
        %v346 = vld [vmem:[#allocation5 + $0x1c8] sm:$0xf]
        %v347 = vld [vmem:[#allocation5 + $0x1cc] sm:$0xf]
        %v348 = vld [vmem:[#allocation5 + $0x1d0] sm:$0xf]
        %v349 = vld [vmem:[#allocation5 + $0x1d4] sm:$0xf]
        %v350 = vld [vmem:[#allocation5 + $0x1d8] sm:$0xf]
        %v351 = vld [vmem:[#allocation5 + $0x1dc] sm:$0xf]
        %v352 = vld [vmem:[#allocation5 + $0x1e0] sm:$0xf]
        %v353 = vld [vmem:[#allocation5 + $0x1e4] sm:$0xf]
        %v354 = vld [vmem:[#allocation5 + $0x1e8] sm:$0xf]
        %v355 = vld [vmem:[#allocation5 + $0x1ec] sm:$0xf]
        %v356 = vld [vmem:[#allocation5 + $0x1f0] sm:$0xf]
        %v357 = vld [vmem:[#allocation5 + $0x1f4] sm:$0xf]
        %v358 = vld [vmem:[#allocation5 + $0x1f8] sm:$0xf]
        %v359 = vld [vmem:[#allocation5 + $0x1fc] sm:$0xf]
        %v360 = vld [vmem:[%s2] sm:$0x1]
        %v362 = vlaneseq
        %v363 = vshrl.u32 %v362, 7
        %v364 = vsub.s32 0, %v363
        %v365 = vrot.slane %v360, %v364
        %v495 = vunpack.c.l.b16 %v232
        %v496 = vunpack.c.l.b16 %v233
        %v497 = vunpack.c.l.b16 %v234
        %v498 = vunpack.c.l.b16 %v235
        %v499 = vunpack.c.l.b16 %v236
        %v500 = vunpack.c.l.b16 %v237
        %v501 = vunpack.c.l.b16 %v238
        %v502 = vunpack.c.l.b16 %v239
        %v503 = vunpack.c.l.b16 %v240
        %v504 = vunpack.c.l.b16 %v241
        %v505 = vunpack.c.l.b16 %v242
        %v506 = vunpack.c.l.b16 %v243
        %v507 = vunpack.c.l.b16 %v244
        %v508 = vunpack.c.l.b16 %v245
        %v509 = vunpack.c.l.b16 %v246
        %v510 = vunpack.c.l.b16 %v247
        %v511 = vunpack.c.l.b16 %v248
        %v512 = vunpack.c.l.b16 %v249
        %v513 = vunpack.c.l.b16 %v250
        %v514 = vunpack.c.l.b16 %v251
        %v515 = vunpack.c.l.b16 %v252
        %v516 = vunpack.c.l.b16 %v253
        %v517 = vunpack.c.l.b16 %v254
        %v518 = vunpack.c.l.b16 %v255
        %v519 = vunpack.c.l.b16 %v256
        %v520 = vunpack.c.l.b16 %v257
        %v521 = vunpack.c.l.b16 %v258
        %v522 = vunpack.c.l.b16 %v259
        %v523 = vunpack.c.l.b16 %v260
        %v524 = vunpack.c.l.b16 %v261
        %v525 = vunpack.c.l.b16 %v262
        %v526 = vunpack.c.l.b16 %v263
        %v527 = vunpack.c.l.b16 %v264
        %v528 = vunpack.c.l.b16 %v265
        %v529 = vunpack.c.l.b16 %v266
        %v530 = vunpack.c.l.b16 %v267
        %v531 = vunpack.c.l.b16 %v268
        %v532 = vunpack.c.l.b16 %v269
        %v533 = vunpack.c.l.b16 %v270
        %v534 = vunpack.c.l.b16 %v271
        %v535 = vunpack.c.l.b16 %v272
        %v536 = vunpack.c.l.b16 %v273
        %v537 = vunpack.c.l.b16 %v274
        %v538 = vunpack.c.l.b16 %v275
        %v539 = vunpack.c.l.b16 %v276
        %v540 = vunpack.c.l.b16 %v277
        %v541 = vunpack.c.l.b16 %v278
        %v542 = vunpack.c.l.b16 %v279
        %v543 = vunpack.c.l.b16 %v280
        %v544 = vunpack.c.l.b16 %v281
        %v545 = vunpack.c.l.b16 %v282
        %v546 = vunpack.c.l.b16 %v283
        %v547 = vunpack.c.l.b16 %v284
        %v548 = vunpack.c.l.b16 %v285
        %v549 = vunpack.c.l.b16 %v286
        %v550 = vunpack.c.l.b16 %v287
        %v551 = vunpack.c.l.b16 %v288
        %v552 = vunpack.c.l.b16 %v289
        %v553 = vunpack.c.l.b16 %v290
        %v554 = vunpack.c.l.b16 %v291
        %v555 = vunpack.c.l.b16 %v292
        %v556 = vunpack.c.l.b16 %v293
        %v557 = vunpack.c.l.b16 %v294
        %v558 = vunpack.c.l.b16 %v295
        %v559 = vunpack.c.l.b16 %v296
        %v560 = vunpack.c.l.b16 %v297
        %v561 = vunpack.c.l.b16 %v298
        %v562 = vunpack.c.l.b16 %v299
        %v563 = vunpack.c.l.b16 %v300
        %v564 = vunpack.c.l.b16 %v301
        %v565 = vunpack.c.l.b16 %v302
        %v566 = vunpack.c.l.b16 %v303
        %v567 = vunpack.c.l.b16 %v304
        %v568 = vunpack.c.l.b16 %v305
        %v569 = vunpack.c.l.b16 %v306
        %v570 = vunpack.c.l.b16 %v307
        %v571 = vunpack.c.l.b16 %v308
        %v572 = vunpack.c.l.b16 %v309
        %v573 = vunpack.c.l.b16 %v310
        %v574 = vunpack.c.l.b16 %v311
        %v575 = vunpack.c.l.b16 %v312
        %v576 = vunpack.c.l.b16 %v313
        %v577 = vunpack.c.l.b16 %v314
        %v578 = vunpack.c.l.b16 %v315
        %v579 = vunpack.c.l.b16 %v316
        %v580 = vunpack.c.l.b16 %v317
        %v581 = vunpack.c.l.b16 %v318
        %v582 = vunpack.c.l.b16 %v319
        %v583 = vunpack.c.l.b16 %v320
        %v584 = vunpack.c.l.b16 %v321
        %v585 = vunpack.c.l.b16 %v322
        %v586 = vunpack.c.l.b16 %v323
        %v587 = vunpack.c.l.b16 %v324
        %v588 = vunpack.c.l.b16 %v325
        %v589 = vunpack.c.l.b16 %v326
        %v590 = vunpack.c.l.b16 %v327
        %v591 = vunpack.c.l.b16 %v328
        %v592 = vunpack.c.l.b16 %v329
        %v593 = vunpack.c.l.b16 %v330
        %v594 = vunpack.c.l.b16 %v331
        %v595 = vunpack.c.l.b16 %v332
        %v596 = vunpack.c.l.b16 %v333
        %v597 = vunpack.c.l.b16 %v334
        %v598 = vunpack.c.l.b16 %v335
        %v599 = vunpack.c.l.b16 %v336
        %v600 = vunpack.c.l.b16 %v337
        %v601 = vunpack.c.l.b16 %v338
        %v602 = vunpack.c.l.b16 %v339
        %v603 = vunpack.c.l.b16 %v340
        %v604 = vunpack.c.l.b16 %v341
        %v605 = vunpack.c.l.b16 %v342
        %v606 = vunpack.c.l.b16 %v343
        %v607 = vunpack.c.l.b16 %v344
        %v608 = vunpack.c.l.b16 %v345
        %v609 = vunpack.c.l.b16 %v346
        %v610 = vunpack.c.l.b16 %v347
        %v611 = vunpack.c.l.b16 %v348
        %v612 = vunpack.c.l.b16 %v349
        %v613 = vunpack.c.l.b16 %v350
        %v614 = vunpack.c.l.b16 %v351
        %v615 = vunpack.c.l.b16 %v352
        %v616 = vunpack.c.l.b16 %v353
        %v617 = vunpack.c.l.b16 %v354
        %v618 = vunpack.c.l.b16 %v355
        %v619 = vunpack.c.l.b16 %v356
        %v620 = vunpack.c.l.b16 %v357
        %v621 = vunpack.c.l.b16 %v358
        %v622 = vunpack.c.l.b16 %v359
        %v623 = vpack.c.b16 %v496, %v495
        %v624 = vpack.c.b16 %v498, %v497
        %v625 = vpack.c.b16 %v500, %v499
        %v626 = vpack.c.b16 %v502, %v501
        %v627 = vpack.c.b16 %v504, %v503
        %v628 = vpack.c.b16 %v506, %v505
        %v629 = vpack.c.b16 %v508, %v507
        %v630 = vpack.c.b16 %v510, %v509
        %v631 = vpack.c.b16 %v512, %v511
        %v632 = vpack.c.b16 %v514, %v513
        %v633 = vpack.c.b16 %v516, %v515
        %v634 = vpack.c.b16 %v518, %v517
        %v635 = vpack.c.b16 %v520, %v519
        %v636 = vpack.c.b16 %v522, %v521
        %v637 = vpack.c.b16 %v524, %v523
        %v638 = vpack.c.b16 %v526, %v525
        %v639 = vpack.c.b16 %v528, %v527
        %v640 = vpack.c.b16 %v530, %v529
        %v641 = vpack.c.b16 %v532, %v531
        %v642 = vpack.c.b16 %v534, %v533
        %v643 = vpack.c.b16 %v536, %v535
        %v644 = vpack.c.b16 %v538, %v537
        %v645 = vpack.c.b16 %v540, %v539
        %v646 = vpack.c.b16 %v542, %v541
        %v647 = vpack.c.b16 %v544, %v543
        %v648 = vpack.c.b16 %v546, %v545
        %v649 = vpack.c.b16 %v548, %v547
        %v650 = vpack.c.b16 %v550, %v549
        %v651 = vpack.c.b16 %v552, %v551
        %v652 = vpack.c.b16 %v554, %v553
        %v653 = vpack.c.b16 %v556, %v555
        %v654 = vpack.c.b16 %v558, %v557
        %v655 = vpack.c.b16 %v560, %v559
        %v656 = vpack.c.b16 %v562, %v561
        %v657 = vpack.c.b16 %v564, %v563
        %v658 = vpack.c.b16 %v566, %v565
        %v659 = vpack.c.b16 %v568, %v567
        %v660 = vpack.c.b16 %v570, %v569
        %v661 = vpack.c.b16 %v572, %v571
        %v662 = vpack.c.b16 %v574, %v573
        %v663 = vpack.c.b16 %v576, %v575
        %v664 = vpack.c.b16 %v578, %v577
        %v665 = vpack.c.b16 %v580, %v579
        %v666 = vpack.c.b16 %v582, %v581
        %v667 = vpack.c.b16 %v584, %v583
        %v668 = vpack.c.b16 %v586, %v585
        %v669 = vpack.c.b16 %v588, %v587
        %v670 = vpack.c.b16 %v590, %v589
        %v671 = vpack.c.b16 %v592, %v591
        %v672 = vpack.c.b16 %v594, %v593
        %v673 = vpack.c.b16 %v596, %v595
        %v674 = vpack.c.b16 %v598, %v597
        %v675 = vpack.c.b16 %v600, %v599
        %v676 = vpack.c.b16 %v602, %v601
        %v677 = vpack.c.b16 %v604, %v603
        %v678 = vpack.c.b16 %v606, %v605
        %v679 = vpack.c.b16 %v608, %v607
        %v680 = vpack.c.b16 %v610, %v609
        %v681 = vpack.c.b16 %v612, %v611
        %v682 = vpack.c.b16 %v614, %v613
        %v683 = vpack.c.b16 %v616, %v615
        %v684 = vpack.c.b16 %v618, %v617
        %v685 = vpack.c.b16 %v620, %v619
        %v686 = vpack.c.b16 %v622, %v621
        %751 = vmatprep.subr.bf16.mxu0 0
        %752 = vmatpush1.bf16.msra.mxu0 %v623
        %753 = vmatprep.subr.bf16.mxu0 0
        %754 = vmatpush1.bf16.msra.mxu0 %v624
        %755 = vmatprep.subr.bf16.mxu0 0
        %756 = vmatpush1.bf16.msra.mxu0 %v625
        %757 = vmatprep.subr.bf16.mxu0 0
        %758 = vmatpush1.bf16.msra.mxu0 %v626
        %759 = vmatprep.subr.bf16.mxu0 0
        %760 = vmatpush1.bf16.msra.mxu0 %v627
        %761 = vmatprep.subr.bf16.mxu0 0
        %762 = vmatpush1.bf16.msra.mxu0 %v628
        %763 = vmatprep.subr.bf16.mxu0 0
        %764 = vmatpush1.bf16.msra.mxu0 %v629
        %765 = vmatprep.subr.bf16.mxu0 0
        %766 = vmatpush1.bf16.msra.mxu0 %v630
        %767 = vmatprep.subr.bf16.mxu0 0
        %768 = vmatpush1.bf16.msra.mxu0 %v631
        %769 = vmatprep.subr.bf16.mxu0 0
        %770 = vmatpush1.bf16.msra.mxu0 %v632
        %771 = vmatprep.subr.bf16.mxu0 0
        %772 = vmatpush1.bf16.msra.mxu0 %v633
        %773 = vmatprep.subr.bf16.mxu0 0
        %774 = vmatpush1.bf16.msra.mxu0 %v634
        %775 = vmatprep.subr.bf16.mxu0 0
        %776 = vmatpush1.bf16.msra.mxu0 %v635
        %777 = vmatprep.subr.bf16.mxu0 0
        %778 = vmatpush1.bf16.msra.mxu0 %v636
        %779 = vmatprep.subr.bf16.mxu0 0
        %780 = vmatpush1.bf16.msra.mxu0 %v637
        %781 = vmatprep.subr.bf16.mxu0 0
        %782 = vmatpush1.bf16.msra.mxu0 %v638
        %783 = vmatprep.mubr.bf16.mxu0 %v225
        %784 = vmatmul.mubr.bf16.gmra.mrb[0].mxu0 %v224
        %v785 = vpop.f32.mrb[0].mxu0
        %v786 = vadd.f32 %v365, %v785
        %v787 = vpop.f32.mrb[0].mxu0
        %v788 = vpop.f32.mrb[0].mxu0
        %v789 = vadd.f32 %v365, %v788
        %v790 = vpop.f32.mrb[0].mxu0
        %791 = vdwg.mxu0
        %792 = vmatprep.subr.bf16.mxu0 0
        %793 = vmatpush1.bf16.msra.mxu0 %v639
        %794 = vmatprep.subr.bf16.mxu0 0
        %795 = vmatpush1.bf16.msra.mxu0 %v640
        %796 = vmatprep.subr.bf16.mxu0 0
        %797 = vmatpush1.bf16.msra.mxu0 %v641
        %798 = vmatprep.subr.bf16.mxu0 0
        %799 = vmatpush1.bf16.msra.mxu0 %v642
        %800 = vmatprep.subr.bf16.mxu0 0
        %801 = vmatpush1.bf16.msra.mxu0 %v643
        %802 = vmatprep.subr.bf16.mxu0 0
        %803 = vmatpush1.bf16.msra.mxu0 %v644
        %804 = vmatprep.subr.bf16.mxu0 0
        %805 = vmatpush1.bf16.msra.mxu0 %v645
        %806 = vmatprep.subr.bf16.mxu0 0
        %807 = vmatpush1.bf16.msra.mxu0 %v646
        %808 = vmatprep.subr.bf16.mxu0 0
        %809 = vmatpush1.bf16.msra.mxu0 %v647
        %810 = vmatprep.subr.bf16.mxu0 0
        %811 = vmatpush1.bf16.msra.mxu0 %v648
        %812 = vmatprep.subr.bf16.mxu0 0
        %813 = vmatpush1.bf16.msra.mxu0 %v649
        %814 = vmatprep.subr.bf16.mxu0 0
        %815 = vmatpush1.bf16.msra.mxu0 %v650
        %816 = vmatprep.subr.bf16.mxu0 0
        %817 = vmatpush1.bf16.msra.mxu0 %v651
        %818 = vmatprep.subr.bf16.mxu0 0
        %819 = vmatpush1.bf16.msra.mxu0 %v652
        %820 = vmatprep.subr.bf16.mxu0 0
        %821 = vmatpush1.bf16.msra.mxu0 %v653
        %822 = vmatprep.subr.bf16.mxu0 0
        %823 = vmatpush1.bf16.msra.mxu0 %v654
        %824 = vmatprep.mubr.bf16.mxu0 %v227
        %825 = vmatmul.mubr.bf16.gmra.mrb[0].mxu0 %v226
        %v826 = vpop.f32.mrb[0].mxu0
        %v827 = vadd.f32 %v786, %v826
        %v828 = vpop.f32.mrb[0].mxu0
        %v829 = vpop.f32.mrb[0].mxu0
        %v830 = vadd.f32 %v789, %v829
        %v831 = vpop.f32.mrb[0].mxu0
        %832 = vdwg.mxu0
        %833 = vmatprep.subr.bf16.mxu0 0
        %834 = vmatpush1.bf16.msra.mxu0 %v655
        %835 = vmatprep.subr.bf16.mxu0 0
        %836 = vmatpush1.bf16.msra.mxu0 %v656
        %837 = vmatprep.subr.bf16.mxu0 0
        %838 = vmatpush1.bf16.msra.mxu0 %v657
        %839 = vmatprep.subr.bf16.mxu0 0
        %840 = vmatpush1.bf16.msra.mxu0 %v658
        %841 = vmatprep.subr.bf16.mxu0 0
        %842 = vmatpush1.bf16.msra.mxu0 %v659
        %843 = vmatprep.subr.bf16.mxu0 0
        %844 = vmatpush1.bf16.msra.mxu0 %v660
        %845 = vmatprep.subr.bf16.mxu0 0
        %846 = vmatpush1.bf16.msra.mxu0 %v661
        %847 = vmatprep.subr.bf16.mxu0 0
        %848 = vmatpush1.bf16.msra.mxu0 %v662
        %849 = vmatprep.subr.bf16.mxu0 0
        %850 = vmatpush1.bf16.msra.mxu0 %v663
        %851 = vmatprep.subr.bf16.mxu0 0
        %852 = vmatpush1.bf16.msra.mxu0 %v664
        %853 = vmatprep.subr.bf16.mxu0 0
        %854 = vmatpush1.bf16.msra.mxu0 %v665
        %855 = vmatprep.subr.bf16.mxu0 0
        %856 = vmatpush1.bf16.msra.mxu0 %v666
        %857 = vmatprep.subr.bf16.mxu0 0
        %858 = vmatpush1.bf16.msra.mxu0 %v667
        %859 = vmatprep.subr.bf16.mxu0 0
        %860 = vmatpush1.bf16.msra.mxu0 %v668
        %861 = vmatprep.subr.bf16.mxu0 0
        %862 = vmatpush1.bf16.msra.mxu0 %v669
        %863 = vmatprep.subr.bf16.mxu0 0
        %864 = vmatpush1.bf16.msra.mxu0 %v670
        %865 = vmatprep.mubr.bf16.mxu0 %v229
        %866 = vmatmul.mubr.bf16.gmra.mrb[0].mxu0 %v228
        %v867 = vpop.f32.mrb[0].mxu0
        %v868 = vadd.f32 %v827, %v867
        %v869 = vpop.f32.mrb[0].mxu0
        %v870 = vpop.f32.mrb[0].mxu0
        %v871 = vadd.f32 %v830, %v870
        %v872 = vpop.f32.mrb[0].mxu0
        %873 = vdwg.mxu0
        %874 = vmatprep.subr.bf16.mxu0 0
        %875 = vmatpush1.bf16.msra.mxu0 %v671
        %876 = vmatprep.subr.bf16.mxu0 0
        %877 = vmatpush1.bf16.msra.mxu0 %v672
        %878 = vmatprep.subr.bf16.mxu0 0
        %879 = vmatpush1.bf16.msra.mxu0 %v673
        %880 = vmatprep.subr.bf16.mxu0 0
        %881 = vmatpush1.bf16.msra.mxu0 %v674
        %882 = vmatprep.subr.bf16.mxu0 0
        %883 = vmatpush1.bf16.msra.mxu0 %v675
        %884 = vmatprep.subr.bf16.mxu0 0
        %885 = vmatpush1.bf16.msra.mxu0 %v676
        %886 = vmatprep.subr.bf16.mxu0 0
        %887 = vmatpush1.bf16.msra.mxu0 %v677
        %888 = vmatprep.subr.bf16.mxu0 0
        %889 = vmatpush1.bf16.msra.mxu0 %v678
        %890 = vmatprep.subr.bf16.mxu0 0
        %891 = vmatpush1.bf16.msra.mxu0 %v679
        %892 = vmatprep.subr.bf16.mxu0 0
        %893 = vmatpush1.bf16.msra.mxu0 %v680
        %894 = vmatprep.subr.bf16.mxu0 0
        %895 = vmatpush1.bf16.msra.mxu0 %v681
        %896 = vmatprep.subr.bf16.mxu0 0
        %897 = vmatpush1.bf16.msra.mxu0 %v682
        %898 = vmatprep.subr.bf16.mxu0 0
        %899 = vmatpush1.bf16.msra.mxu0 %v683
        %900 = vmatprep.subr.bf16.mxu0 0
        %901 = vmatpush1.bf16.msra.mxu0 %v684
        %902 = vmatprep.subr.bf16.mxu0 0
        %903 = vmatpush1.bf16.msra.mxu0 %v685
        %904 = vmatprep.subr.bf16.mxu0 0
        %905 = vmatpush1.bf16.msra.mxu0 %v686
        %906 = vmatprep.mubr.bf16.mxu0 %v231
        %907 = vmatmul.mubr.bf16.gmra.mrb[0].mxu0 %v230
        %v908 = vpop.f32.mrb[0].mxu0
        %v909 = vadd.f32 %v868, %v908
        %v910 = vpop.f32.mrb[0].mxu0
        %v911 = vpop.f32.mrb[0].mxu0
        %v912 = vadd.f32 %v871, %v911
        %v913 = vpop.f32.mrb[0].mxu0
        %914 = vdwg.mxu0
        %v915 = vpack.c.bf16 %v912, %v909
        %v917 = vunpack.c.l.b16 %v915
        %v918 = vunpack.c.h.b16 %v915
        %v919 = vpack.c.b16 %v917, %v917
        %v920 = vpack.c.b16 %v918, %v918
        %923 = vst [vmem:[%s204] sm:$0xf] %v919
        %924 = vst [vmem:[%s204 + $0x4] sm:$0xf] %v920
        %s925 = sand.u32 %s97, 1
        %s926 = scalar_lea.sflag [#allocation4], %s925
        %s927 = sand.u32 %s97, 1
        %s928 = smul.addr %s927, 8
        %s929 = scalar_lea.vmem [#allocation7], %s928
        // Predicated region
        $region41: #{tpu_custom_call.1} parent=31 // pred_check
          %p930 = pneg %p107
        $region42: #{tpu_custom_call.1} parent=31 // pred_check_branch
          %932 = sbr.rel (%p930) target = $region44
        $region43: #{tpu_custom_call.1} parent=31 // pred_region
          %s933 = smul.u32 2, %s21
          %s935 = ssub.s32 128, 128
          %936 = vsyncadd %s926, %s935
          %s937 = smul.addr %s933, 64
          %s938 = scalar_lea.hbm %s3, %s937
          %s939 = sshll.u32 %s929, 4
          %s940 = int_to_ptr.vmem [resolvable:$true] %s939
          %945 = dma.vmem_to_hbm [thread:$0]  %s940, 128, %s938, %s926, 64, 64, 4
        $region44: #{tpu_custom_call.1} parent=31 // pred_fallthru
          _
      $region32: #{tpu_custom_call.1} parent=5 // pred_fallthru
        _
      %p946 = scmp.le.s32.totalorder 2, %s16
      // Predicated region
      $region45: #{tpu_custom_call.1} parent=5 // pred_check
        %p947 = pneg %p946
      $region46: #{tpu_custom_call.1} parent=5 // pred_check_branch
        %949 = sbr.rel (%p947) target = $region48
      $region47: #{tpu_custom_call.1} parent=5 // pred_region
        %s950 = ssub.s32 %s16, 2
        // Predicated region
        $region49: #{tpu_custom_call.1} parent=47 // pred_check
          %p951 = pneg %p113
        $region50: #{tpu_custom_call.1} parent=47 // pred_check_branch
          %953 = sbr.rel (%p951) target = $region52
        $region51: #{tpu_custom_call.1} parent=47 // pred_region
          %s954 = sand.u32 %s98, 1
          %s955 = scalar_lea.sflag [#allocation4], %s954
          %s956 = sand.u32 %s98, 1
          %s957 = smul.addr %s956, 8
          %s958 = scalar_lea.vmem [#allocation7], %s957
          %959 = dma.done %s955, 128
        $region52: #{tpu_custom_call.1} parent=47 // pred_fallthru
          _
      $region48: #{tpu_custom_call.1} parent=5 // pred_fallthru
        _
    $region6: #{tpu_custom_call.1} parent=1 // loop_footer
      %s20 = sadd.s32 1, %s16
    $region7: #{tpu_custom_call.1} parent=1 // loop_footer_branch
      %15 = sbr.rel target = $region3
    $region8: #{tpu_custom_call.1} parent=1 // loop_exit
      _
    %960 = vsyncpa [#allocation3], 1
    %s961 = scalar_lea.sflag [#allocation3], 1
    %962 = vsyncpa %s961, 1
    %963 = vsyncpa [#allocation6], 1
    %964 = vsyncpa [#allocation4], 1
    %s965 = scalar_lea.sflag [#allocation4], 1
    %966 = vsyncpa %s965, 1

</llo_original>
